<compile_context>
chip_gen: v7x
topology: tpu7x:2x2x1
jax: 0.10.0
libtpu: 0.0.40
codegen_flags: <defaults>
</compile_context>

<pallas_src>
import math
import numpy as np
import jax
import jax.numpy as jnp
from jax import lax
from jax.experimental import pallas as pl
from jax.experimental.pallas import tpu as pltpu

GAMMA = 10.0
ERF_SCALE = GAMMA * math.sqrt(math.pi / 2.0)     # gamma*sqrt(pi/2) ~= 12.533
INV_SQRT2 = 1.0 / math.sqrt(2.0)
NEG_HALF_INV_G2 = -0.5 / (GAMMA * GAMMA)         # exp argument scale
Z_SCALE = INV_SQRT2 / GAMMA                      # erf argument scale

# Abramowitz & Stegun 7.1.26 rational erf approximation (max abs err ~1.5e-7).
_A1, _A2, _A3, _A4, _A5 = (0.254829592, -0.284496736, 1.421413741,
                           -1.453152027, 1.061405429)
_P = 0.3275911


def _make_rbf_kernel(num_func, chunk, n_chunks):
    def kernel(c_ref, x_ref, w_ref, o1_ref, o2_ref):
        # c_ref: (F,) f32 SMEM (centers)
        # x_ref: (Rt, Lt) f32 VMEM;  w_ref: (Rt, F) f32 VMEM (per-row weights)
        centers = [c_ref[f] for f in range(num_func)]   # scalar reads, hoisted

        def body(j, carry):
            j0 = pl.multiple_of(j * chunk, chunk)
            x = x_ref[:, pl.ds(j0, chunk)]
            acc1 = jnp.zeros_like(x)
            acc2 = jnp.zeros_like(x)
            for f in range(num_func):                    # static unroll, F small
                wf = w_ref[:, f:f + 1]                   # (Rt, 1) per-row weight
                u = x - centers[f]
                # gaussian basis; also equals exp(-z^2) used by the erf approximation
                phi = jnp.exp(u * u * NEG_HALF_INV_G2)
                z = u * Z_SCALE
                az = jnp.abs(z)
                den = 1.0 + _P * az
                r = pl.reciprocal(den, approx=True)
                t = r * (2.0 - den * r)                  # one Newton step -> ~exact
                poly = ((((_A5 * t + _A4) * t + _A3) * t + _A2) * t + _A1) * t
                y = 1.0 - poly * phi                     # erf(|z|), exp reused
                erf = jnp.where(u < 0.0, -y, y)
                acc1 = acc1 + phi * wf
                acc2 = acc2 + erf * wf
            o1_ref[:, pl.ds(j0, chunk)] = acc1
            o2_ref[:, pl.ds(j0, chunk)] = acc2 * ERF_SCALE
            return carry

        lax.fori_loop(0, n_chunks, body, 0, unroll=True)

    return kernel


def rbf_forward(x_nchw, centers, weight):
    """x_nchw: (N, C, H, W) f32; centers: (F,) f32; weight: (F, 1, C) f32."""
    N, C, H, W = x_nchw.shape
    F = centers.shape[0]
    assert weight.shape == (F, 1, C)
    R, L = N * C, H * W

    # Free reshape (NCHW row-major) -> (N*C, H*W); no transposes, no padding copies.
    x2 = jnp.asarray(x_nchw, jnp.float32).reshape(R, L)
    # Tiny (R, F) per-row weight table: row n*C+c holds weight[:, 0, c].
    w_rows = jnp.tile(jnp.asarray(weight, jnp.float32).reshape(F, C).T, (N, 1))
    c = jnp.asarray(centers, jnp.float32)

    # --- tile selection: full sublanes (multiple of 8 rows), lane-dense big tiles ---
    if R >= 8:
        row_tile = min(32, (R // 8) * 8)
    else:
        row_tile = R                      # full dim (degenerate small input)
    if L >= 512:
        chunk = 512                       # in-register sub-chunk width
        lane_tile = min(2048, (L // 512) * 512)
    elif L >= 128:
        chunk = 128
        lane_tile = (L // 128) * 128
    else:
        chunk = L                         # full dim (degenerate small input)
        lane_tile = L
    # v7x megacore: keep at least 2 grid steps when possible so both TensorCores get work.
    if pl.cdiv(R, row_tile) * pl.cdiv(L, lane_tile) < 2 and lane_tile >= 2 * chunk:
        lane_tile = (lane_tile // (2 * chunk)) * chunk
    n_chunks = lane_tile // chunk
    grid = (pl.cdiv(R, row_tile), pl.cdiv(L, lane_tile))

    kernel = _make_rbf_kernel(F, chunk, n_chunks)
    out1, out2 = pl.pallas_call(
        kernel,
        grid=grid,
        in_specs=[
            pl.BlockSpec(memory_space=pltpu.MemorySpace.SMEM),          # centers (F,)
            pl.BlockSpec((row_tile, lane_tile), lambda r, l: (r, l)),   # x tile
            pl.BlockSpec((row_tile, F), lambda r, l: (r, 0)),           # per-row weights
        ],
        out_specs=[
            pl.BlockSpec((row_tile, lane_tile), lambda r, l: (r, l)),
            pl.BlockSpec((row_tile, lane_tile), lambda r, l: (r, l)),
        ],
        out_shape=[
            jax.ShapeDtypeStruct((R, L), jnp.float32),
            jax.ShapeDtypeStruct((R, L), jnp.float32),
        ],
        compiler_params=pltpu.CompilerParams(
            dimension_semantics=("parallel", "parallel")),
    )(c, x2, w_rows)

    # Free reshapes back to NCHW.
    return out1.reshape(N, C, H, W), out2.reshape(N, C, H, W)


def rbf_reference(x_nchw, centers, weight):
    # Pure-JAX mirror of the PyTorch forward (gaussian branch).
    F = centers.shape[0]
    C = x_nchw.shape[1]
    d = (x_nchw[None] - centers[:, None, None, None, None]) / GAMMA   # (F,N,C,H,W)
    w = weight.reshape(F, 1, C, 1, 1)
    out1 = jnp.sum(jnp.exp(-0.5 * d * d) * w, axis=0)
    out2 = jnp.sum(ERF_SCALE * jax.scipy.special.erf(d * INV_SQRT2) * w, axis=0)
    return out1, out2


if __name__ == "__main__":
    num_func = 8       # F
    num_filters = 4    # C
    N, H, W = 2, 16, 16

    key = jax.random.PRNGKey(0)
    kx, kw = jax.random.split(key)
    # Inputs spanning the centers' range so the basis functions are exercised.
    x = jax.random.uniform(kx, (N, num_filters, H, W), jnp.float32,
                           minval=-300.0, maxval=300.0)

    # Deterministic parameter init (synthetic): centers buffer per __init__,
    # weight Parameter from a standard normal.
    centers = jnp.asarray(np.linspace(-310.0, 310.0, num_func), jnp.float32)
    weight = jax.random.normal(kw, (num_func, 1, num_filters), jnp.float32)

    out1, out2 = rbf_forward(x, centers, weight)
    jax.block_until_ready((out1, out2))

    ref1, ref2 = rbf_reference(x, centers, weight)
    assert out1.shape == (N, num_filters, H, W) and out2.shape == out1.shape
    np.testing.assert_allclose(np.asarray(out1), np.asarray(ref1), rtol=1e-5, atol=1e-5)
    np.testing.assert_allclose(np.asarray(out2), np.asarray(ref2), rtol=1e-4, atol=1e-3)

    print("KERNEL_OK")
</pallas_src>

<mosaic_0001>
module attributes {stable_mosaic.version = 11 : i64} {
  func.func @kernel(%arg0: i32, %arg1: i32, %arg2: memref<8xf32, #tpu.memory_space<smem>>, %arg3: memref<8x128xf32, #tpu.memory_space<vmem>>, %arg4: memref<8x8xf32, #tpu.memory_space<vmem>>, %arg5: memref<8x128xf32, #tpu.memory_space<vmem>>, %arg6: memref<8x128xf32, #tpu.memory_space<vmem>>) attributes {dimension_semantics = [#tpu.dimension_semantics<parallel>, #tpu.dimension_semantics<parallel>], iteration_bounds = array<i64: 1, 2>, scalar_prefetch = 0 : i64, scratch_operands = 0 : i64, tpu.core_type = #tpu.core_type<tc>, window_params = [{transform_indices = @transform_0, window_bounds = array<i64: 8>}, {transform_indices = @transform_1, window_bounds = array<i64: 8, 128>}, {transform_indices = @transform_2, window_bounds = array<i64: 8, 8>}, {transform_indices = @transform_3, window_bounds = array<i64: 8, 128>}, {transform_indices = @transform_4, window_bounds = array<i64: 8, 128>}]} {
    %c0 = arith.constant 0 : index
    %0 = memref.load %arg2[%c0] : memref<8xf32, #tpu.memory_space<smem>>
    %c1 = arith.constant 1 : index
    %1 = memref.load %arg2[%c1] : memref<8xf32, #tpu.memory_space<smem>>
    %c2 = arith.constant 2 : index
    %2 = memref.load %arg2[%c2] : memref<8xf32, #tpu.memory_space<smem>>
    %c3 = arith.constant 3 : index
    %3 = memref.load %arg2[%c3] : memref<8xf32, #tpu.memory_space<smem>>
    %c4 = arith.constant 4 : index
    %4 = memref.load %arg2[%c4] : memref<8xf32, #tpu.memory_space<smem>>
    %c5 = arith.constant 5 : index
    %5 = memref.load %arg2[%c5] : memref<8xf32, #tpu.memory_space<smem>>
    %c6 = arith.constant 6 : index
    %6 = memref.load %arg2[%c6] : memref<8xf32, #tpu.memory_space<smem>>
    %c7 = arith.constant 7 : index
    %7 = memref.load %arg2[%c7] : memref<8xf32, #tpu.memory_space<smem>>
    %c0_i32 = arith.constant 0 : i32
    %c128_i32 = arith.constant 128 : i32
    %8 = arith.muli %c0_i32, %c128_i32 : i32
    %9 = tpu.assume_multiple %8, 128 : i32
    %c0_0 = arith.constant 0 : index
    %10 = arith.index_cast %9 : i32 to index
    %11 = vector.load %arg3[%c0_0, %10] : memref<8x128xf32, #tpu.memory_space<vmem>>, vector<8x128xf32>
    %cst = arith.constant 0.000000e+00 : f32
    %12 = vector.broadcast %cst : f32 to vector<8x128xf32>
    %cst_1 = arith.constant 0.000000e+00 : f32
    %13 = vector.broadcast %cst_1 : f32 to vector<8x128xf32>
    %c0_2 = arith.constant 0 : index
    %c0_3 = arith.constant 0 : index
    %14 = vector.load %arg4[%c0_2, %c0_3] : memref<8x8xf32, #tpu.memory_space<vmem>>, vector<8x1xf32>
    %15 = vector.broadcast %0 : f32 to vector<8x128xf32>
    %16 = arith.subf %11, %15 : vector<8x128xf32>
    %17 = arith.mulf %16, %16 : vector<8x128xf32>
    %cst_4 = arith.constant -5.000000e-03 : f32
    %18 = vector.broadcast %cst_4 : f32 to vector<8x128xf32>
    %19 = arith.mulf %17, %18 : vector<8x128xf32>
    %20 = math.exp %19 : vector<8x128xf32>
    %cst_5 = arith.constant 0.0707106814 : f32
    %21 = vector.broadcast %cst_5 : f32 to vector<8x128xf32>
    %22 = arith.mulf %16, %21 : vector<8x128xf32>
    %23 = math.absf %22 : vector<8x128xf32>
    %cst_6 = arith.constant 0.327591091 : f32
    %24 = vector.broadcast %cst_6 : f32 to vector<8x128xf32>
    %25 = arith.mulf %24, %23 : vector<8x128xf32>
    %cst_7 = arith.constant 1.000000e+00 : f32
    %26 = vector.broadcast %cst_7 : f32 to vector<8x128xf32>
    %27 = arith.addf %26, %25 : vector<8x128xf32>
    %28 = tpu.reciprocal %27 {approx = true} : vector<8x128xf32> -> vector<8x128xf32>
    %29 = arith.mulf %27, %28 : vector<8x128xf32>
    %cst_8 = arith.constant 2.000000e+00 : f32
    %30 = vector.broadcast %cst_8 : f32 to vector<8x128xf32>
    %31 = arith.subf %30, %29 : vector<8x128xf32>
    %32 = arith.mulf %28, %31 : vector<8x128xf32>
    %cst_9 = arith.constant 1.06140542 : f32
    %33 = vector.broadcast %cst_9 : f32 to vector<8x128xf32>
    %34 = arith.mulf %33, %32 : vector<8x128xf32>
    %cst_10 = arith.constant -1.45315206 : f32
    %35 = vector.broadcast %cst_10 : f32 to vector<8x128xf32>
    %36 = arith.addf %34, %35 : vector<8x128xf32>
    %37 = arith.mulf %36, %32 : vector<8x128xf32>
    %cst_11 = arith.constant 1.42141378 : f32
    %38 = vector.broadcast %cst_11 : f32 to vector<8x128xf32>
    %39 = arith.addf %37, %38 : vector<8x128xf32>
    %40 = arith.mulf %39, %32 : vector<8x128xf32>
    %cst_12 = arith.constant -0.284496725 : f32
    %41 = vector.broadcast %cst_12 : f32 to vector<8x128xf32>
    %42 = arith.addf %40, %41 : vector<8x128xf32>
    %43 = arith.mulf %42, %32 : vector<8x128xf32>
    %cst_13 = arith.constant 0.254829586 : f32
    %44 = vector.broadcast %cst_13 : f32 to vector<8x128xf32>
    %45 = arith.addf %43, %44 : vector<8x128xf32>
    %46 = arith.mulf %45, %32 : vector<8x128xf32>
    %47 = arith.mulf %46, %20 : vector<8x128xf32>
    %cst_14 = arith.constant 1.000000e+00 : f32
    %48 = vector.broadcast %cst_14 : f32 to vector<8x128xf32>
    %49 = arith.subf %48, %47 : vector<8x128xf32>
    %cst_15 = arith.constant 0.000000e+00 : f32
    %50 = vector.broadcast %cst_15 : f32 to vector<8x128xf32>
    %51 = arith.cmpf olt, %16, %50 : vector<8x128xf32>
    %cst_16 = arith.constant 0.000000e+00 : f32
    %52 = vector.broadcast %cst_16 : f32 to vector<8x128xf32>
    %53 = arith.subf %52, %49 : vector<8x128xf32>
    %54 = arith.select %51, %53, %49 : vector<8x128xi1>, vector<8x128xf32>
    %55 = vector.broadcast %14 : vector<8x1xf32> to vector<8x128xf32>
    %56 = arith.mulf %20, %55 : vector<8x128xf32>
    %57 = arith.addf %12, %56 : vector<8x128xf32>
    %58 = vector.broadcast %14 : vector<8x1xf32> to vector<8x128xf32>
    %59 = arith.mulf %54, %58 : vector<8x128xf32>
    %60 = arith.addf %13, %59 : vector<8x128xf32>
    %c0_17 = arith.constant 0 : index
    %c1_18 = arith.constant 1 : index
    %61 = vector.load %arg4[%c0_17, %c1_18] : memref<8x8xf32, #tpu.memory_space<vmem>>, vector<8x1xf32>
    %62 = vector.broadcast %1 : f32 to vector<8x128xf32>
    %63 = arith.subf %11, %62 : vector<8x128xf32>
    %64 = arith.mulf %63, %63 : vector<8x128xf32>
    %cst_19 = arith.constant -5.000000e-03 : f32
    %65 = vector.broadcast %cst_19 : f32 to vector<8x128xf32>
    %66 = arith.mulf %64, %65 : vector<8x128xf32>
    %67 = math.exp %66 : vector<8x128xf32>
    %cst_20 = arith.constant 0.0707106814 : f32
    %68 = vector.broadcast %cst_20 : f32 to vector<8x128xf32>
    %69 = arith.mulf %63, %68 : vector<8x128xf32>
    %70 = math.absf %69 : vector<8x128xf32>
    %cst_21 = arith.constant 0.327591091 : f32
    %71 = vector.broadcast %cst_21 : f32 to vector<8x128xf32>
    %72 = arith.mulf %71, %70 : vector<8x128xf32>
    %cst_22 = arith.constant 1.000000e+00 : f32
    %73 = vector.broadcast %cst_22 : f32 to vector<8x128xf32>
    %74 = arith.addf %73, %72 : vector<8x128xf32>
    %75 = tpu.reciprocal %74 {approx = true} : vector<8x128xf32> -> vector<8x128xf32>
    %76 = arith.mulf %74, %75 : vector<8x128xf32>
    %cst_23 = arith.constant 2.000000e+00 : f32
    %77 = vector.broadcast %cst_23 : f32 to vector<8x128xf32>
    %78 = arith.subf %77, %76 : vector<8x128xf32>
    %79 = arith.mulf %75, %78 : vector<8x128xf32>
    %cst_24 = arith.constant 1.06140542 : f32
    %80 = vector.broadcast %cst_24 : f32 to vector<8x128xf32>
    %81 = arith.mulf %80, %79 : vector<8x128xf32>
    %cst_25 = arith.constant -1.45315206 : f32
    %82 = vector.broadcast %cst_25 : f32 to vector<8x128xf32>
    %83 = arith.addf %81, %82 : vector<8x128xf32>
    %84 = arith.mulf %83, %79 : vector<8x128xf32>
    %cst_26 = arith.constant 1.42141378 : f32
    %85 = vector.broadcast %cst_26 : f32 to vector<8x128xf32>
    %86 = arith.addf %84, %85 : vector<8x128xf32>
    %87 = arith.mulf %86, %79 : vector<8x128xf32>
    %cst_27 = arith.constant -0.284496725 : f32
    %88 = vector.broadcast %cst_27 : f32 to vector<8x128xf32>
    %89 = arith.addf %87, %88 : vector<8x128xf32>
    %90 = arith.mulf %89, %79 : vector<8x128xf32>
    %cst_28 = arith.constant 0.254829586 : f32
    %91 = vector.broadcast %cst_28 : f32 to vector<8x128xf32>
    %92 = arith.addf %90, %91 : vector<8x128xf32>
    %93 = arith.mulf %92, %79 : vector<8x128xf32>
    %94 = arith.mulf %93, %67 : vector<8x128xf32>
    %cst_29 = arith.constant 1.000000e+00 : f32
    %95 = vector.broadcast %cst_29 : f32 to vector<8x128xf32>
    %96 = arith.subf %95, %94 : vector<8x128xf32>
    %cst_30 = arith.constant 0.000000e+00 : f32
    %97 = vector.broadcast %cst_30 : f32 to vector<8x128xf32>
    %98 = arith.cmpf olt, %63, %97 : vector<8x128xf32>
    %cst_31 = arith.constant 0.000000e+00 : f32
    %99 = vector.broadcast %cst_31 : f32 to vector<8x128xf32>
    %100 = arith.subf %99, %96 : vector<8x128xf32>
    %101 = arith.select %98, %100, %96 : vector<8x128xi1>, vector<8x128xf32>
    %102 = vector.broadcast %61 : vector<8x1xf32> to vector<8x128xf32>
    %103 = arith.mulf %67, %102 : vector<8x128xf32>
    %104 = arith.addf %57, %103 : vector<8x128xf32>
    %105 = vector.broadcast %61 : vector<8x1xf32> to vector<8x128xf32>
    %106 = arith.mulf %101, %105 : vector<8x128xf32>
    %107 = arith.addf %60, %106 : vector<8x128xf32>
    %c0_32 = arith.constant 0 : index
    %c2_33 = arith.constant 2 : index
    %108 = vector.load %arg4[%c0_32, %c2_33] : memref<8x8xf32, #tpu.memory_space<vmem>>, vector<8x1xf32>
    %109 = vector.broadcast %2 : f32 to vector<8x128xf32>
    %110 = arith.subf %11, %109 : vector<8x128xf32>
    %111 = arith.mulf %110, %110 : vector<8x128xf32>
    %cst_34 = arith.constant -5.000000e-03 : f32
    %112 = vector.broadcast %cst_34 : f32 to vector<8x128xf32>
    %113 = arith.mulf %111, %112 : vector<8x128xf32>
    %114 = math.exp %113 : vector<8x128xf32>
    %cst_35 = arith.constant 0.0707106814 : f32
    %115 = vector.broadcast %cst_35 : f32 to vector<8x128xf32>
    %116 = arith.mulf %110, %115 : vector<8x128xf32>
    %117 = math.absf %116 : vector<8x128xf32>
    %cst_36 = arith.constant 0.327591091 : f32
    %118 = vector.broadcast %cst_36 : f32 to vector<8x128xf32>
    %119 = arith.mulf %118, %117 : vector<8x128xf32>
    %cst_37 = arith.constant 1.000000e+00 : f32
    %120 = vector.broadcast %cst_37 : f32 to vector<8x128xf32>
    %121 = arith.addf %120, %119 : vector<8x128xf32>
    %122 = tpu.reciprocal %121 {approx = true} : vector<8x128xf32> -> vector<8x128xf32>
    %123 = arith.mulf %121, %122 : vector<8x128xf32>
    %cst_38 = arith.constant 2.000000e+00 : f32
    %124 = vector.broadcast %cst_38 : f32 to vector<8x128xf32>
    %125 = arith.subf %124, %123 : vector<8x128xf32>
    %126 = arith.mulf %122, %125 : vector<8x128xf32>
    %cst_39 = arith.constant 1.06140542 : f32
    %127 = vector.broadcast %cst_39 : f32 to vector<8x128xf32>
    %128 = arith.mulf %127, %126 : vector<8x128xf32>
    %cst_40 = arith.constant -1.45315206 : f32
    %129 = vector.broadcast %cst_40 : f32 to vector<8x128xf32>
    %130 = arith.addf %128, %129 : vector<8x128xf32>
    %131 = arith.mulf %130, %126 : vector<8x128xf32>
    %cst_41 = arith.constant 1.42141378 : f32
    %132 = vector.broadcast %cst_41 : f32 to vector<8x128xf32>
    %133 = arith.addf %131, %132 : vector<8x128xf32>
    %134 = arith.mulf %133, %126 : vector<8x128xf32>
    %cst_42 = arith.constant -0.284496725 : f32
    %135 = vector.broadcast %cst_42 : f32 to vector<8x128xf32>
    %136 = arith.addf %134, %135 : vector<8x128xf32>
    %137 = arith.mulf %136, %126 : vector<8x128xf32>
    %cst_43 = arith.constant 0.254829586 : f32
    %138 = vector.broadcast %cst_43 : f32 to vector<8x128xf32>
    %139 = arith.addf %137, %138 : vector<8x128xf32>
    %140 = arith.mulf %139, %126 : vector<8x128xf32>
    %141 = arith.mulf %140, %114 : vector<8x128xf32>
    %cst_44 = arith.constant 1.000000e+00 : f32
    %142 = vector.broadcast %cst_44 : f32 to vector<8x128xf32>
    %143 = arith.subf %142, %141 : vector<8x128xf32>
    %cst_45 = arith.constant 0.000000e+00 : f32
    %144 = vector.broadcast %cst_45 : f32 to vector<8x128xf32>
    %145 = arith.cmpf olt, %110, %144 : vector<8x128xf32>
    %cst_46 = arith.constant 0.000000e+00 : f32
    %146 = vector.broadcast %cst_46 : f32 to vector<8x128xf32>
    %147 = arith.subf %146, %143 : vector<8x128xf32>
    %148 = arith.select %145, %147, %143 : vector<8x128xi1>, vector<8x128xf32>
    %149 = vector.broadcast %108 : vector<8x1xf32> to vector<8x128xf32>
    %150 = arith.mulf %114, %149 : vector<8x128xf32>
    %151 = arith.addf %104, %150 : vector<8x128xf32>
    %152 = vector.broadcast %108 : vector<8x1xf32> to vector<8x128xf32>
    %153 = arith.mulf %148, %152 : vector<8x128xf32>
    %154 = arith.addf %107, %153 : vector<8x128xf32>
    %c0_47 = arith.constant 0 : index
    %c3_48 = arith.constant 3 : index
    %155 = vector.load %arg4[%c0_47, %c3_48] : memref<8x8xf32, #tpu.memory_space<vmem>>, vector<8x1xf32>
    %156 = vector.broadcast %3 : f32 to vector<8x128xf32>
    %157 = arith.subf %11, %156 : vector<8x128xf32>
    %158 = arith.mulf %157, %157 : vector<8x128xf32>
    %cst_49 = arith.constant -5.000000e-03 : f32
    %159 = vector.broadcast %cst_49 : f32 to vector<8x128xf32>
    %160 = arith.mulf %158, %159 : vector<8x128xf32>
    %161 = math.exp %160 : vector<8x128xf32>
    %cst_50 = arith.constant 0.0707106814 : f32
    %162 = vector.broadcast %cst_50 : f32 to vector<8x128xf32>
    %163 = arith.mulf %157, %162 : vector<8x128xf32>
    %164 = math.absf %163 : vector<8x128xf32>
    %cst_51 = arith.constant 0.327591091 : f32
    %165 = vector.broadcast %cst_51 : f32 to vector<8x128xf32>
    %166 = arith.mulf %165, %164 : vector<8x128xf32>
    %cst_52 = arith.constant 1.000000e+00 : f32
    %167 = vector.broadcast %cst_52 : f32 to vector<8x128xf32>
    %168 = arith.addf %167, %166 : vector<8x128xf32>
    %169 = tpu.reciprocal %168 {approx = true} : vector<8x128xf32> -> vector<8x128xf32>
    %170 = arith.mulf %168, %169 : vector<8x128xf32>
    %cst_53 = arith.constant 2.000000e+00 : f32
    %171 = vector.broadcast %cst_53 : f32 to vector<8x128xf32>
    %172 = arith.subf %171, %170 : vector<8x128xf32>
    %173 = arith.mulf %169, %172 : vector<8x128xf32>
    %cst_54 = arith.constant 1.06140542 : f32
    %174 = vector.broadcast %cst_54 : f32 to vector<8x128xf32>
    %175 = arith.mulf %174, %173 : vector<8x128xf32>
    %cst_55 = arith.constant -1.45315206 : f32
    %176 = vector.broadcast %cst_55 : f32 to vector<8x128xf32>
    %177 = arith.addf %175, %176 : vector<8x128xf32>
    %178 = arith.mulf %177, %173 : vector<8x128xf32>
    %cst_56 = arith.constant 1.42141378 : f32
    %179 = vector.broadcast %cst_56 : f32 to vector<8x128xf32>
    %180 = arith.addf %178, %179 : vector<8x128xf32>
    %181 = arith.mulf %180, %173 : vector<8x128xf32>
    %cst_57 = arith.constant -0.284496725 : f32
    %182 = vector.broadcast %cst_57 : f32 to vector<8x128xf32>
    %183 = arith.addf %181, %182 : vector<8x128xf32>
    %184 = arith.mulf %183, %173 : vector<8x128xf32>
    %cst_58 = arith.constant 0.254829586 : f32
    %185 = vector.broadcast %cst_58 : f32 to vector<8x128xf32>
    %186 = arith.addf %184, %185 : vector<8x128xf32>
    %187 = arith.mulf %186, %173 : vector<8x128xf32>
    %188 = arith.mulf %187, %161 : vector<8x128xf32>
    %cst_59 = arith.constant 1.000000e+00 : f32
    %189 = vector.broadcast %cst_59 : f32 to vector<8x128xf32>
    %190 = arith.subf %189, %188 : vector<8x128xf32>
    %cst_60 = arith.constant 0.000000e+00 : f32
    %191 = vector.broadcast %cst_60 : f32 to vector<8x128xf32>
    %192 = arith.cmpf olt, %157, %191 : vector<8x128xf32>
    %cst_61 = arith.constant 0.000000e+00 : f32
    %193 = vector.broadcast %cst_61 : f32 to vector<8x128xf32>
    %194 = arith.subf %193, %190 : vector<8x128xf32>
    %195 = arith.select %192, %194, %190 : vector<8x128xi1>, vector<8x128xf32>
    %196 = vector.broadcast %155 : vector<8x1xf32> to vector<8x128xf32>
    %197 = arith.mulf %161, %196 : vector<8x128xf32>
    %198 = arith.addf %151, %197 : vector<8x128xf32>
    %199 = vector.broadcast %155 : vector<8x1xf32> to vector<8x128xf32>
    %200 = arith.mulf %195, %199 : vector<8x128xf32>
    %201 = arith.addf %154, %200 : vector<8x128xf32>
    %c0_62 = arith.constant 0 : index
    %c4_63 = arith.constant 4 : index
    %202 = vector.load %arg4[%c0_62, %c4_63] : memref<8x8xf32, #tpu.memory_space<vmem>>, vector<8x1xf32>
    %203 = vector.broadcast %4 : f32 to vector<8x128xf32>
    %204 = arith.subf %11, %203 : vector<8x128xf32>
    %205 = arith.mulf %204, %204 : vector<8x128xf32>
    %cst_64 = arith.constant -5.000000e-03 : f32
    %206 = vector.broadcast %cst_64 : f32 to vector<8x128xf32>
    %207 = arith.mulf %205, %206 : vector<8x128xf32>
    %208 = math.exp %207 : vector<8x128xf32>
    %cst_65 = arith.constant 0.0707106814 : f32
    %209 = vector.broadcast %cst_65 : f32 to vector<8x128xf32>
    %210 = arith.mulf %204, %209 : vector<8x128xf32>
    %211 = math.absf %210 : vector<8x128xf32>
    %cst_66 = arith.constant 0.327591091 : f32
    %212 = vector.broadcast %cst_66 : f32 to vector<8x128xf32>
    %213 = arith.mulf %212, %211 : vector<8x128xf32>
    %cst_67 = arith.constant 1.000000e+00 : f32
    %214 = vector.broadcast %cst_67 : f32 to vector<8x128xf32>
    %215 = arith.addf %214, %213 : vector<8x128xf32>
    %216 = tpu.reciprocal %215 {approx = true} : vector<8x128xf32> -> vector<8x128xf32>
    %217 = arith.mulf %215, %216 : vector<8x128xf32>
    %cst_68 = arith.constant 2.000000e+00 : f32
    %218 = vector.broadcast %cst_68 : f32 to vector<8x128xf32>
    %219 = arith.subf %218, %217 : vector<8x128xf32>
    %220 = arith.mulf %216, %219 : vector<8x128xf32>
    %cst_69 = arith.constant 1.06140542 : f32
    %221 = vector.broadcast %cst_69 : f32 to vector<8x128xf32>
    %222 = arith.mulf %221, %220 : vector<8x128xf32>
    %cst_70 = arith.constant -1.45315206 : f32
    %223 = vector.broadcast %cst_70 : f32 to vector<8x128xf32>
    %224 = arith.addf %222, %223 : vector<8x128xf32>
    %225 = arith.mulf %224, %220 : vector<8x128xf32>
    %cst_71 = arith.constant 1.42141378 : f32
    %226 = vector.broadcast %cst_71 : f32 to vector<8x128xf32>
    %227 = arith.addf %225, %226 : vector<8x128xf32>
    %228 = arith.mulf %227, %220 : vector<8x128xf32>
    %cst_72 = arith.constant -0.284496725 : f32
    %229 = vector.broadcast %cst_72 : f32 to vector<8x128xf32>
    %230 = arith.addf %228, %229 : vector<8x128xf32>
    %231 = arith.mulf %230, %220 : vector<8x128xf32>
    %cst_73 = arith.constant 0.254829586 : f32
    %232 = vector.broadcast %cst_73 : f32 to vector<8x128xf32>
    %233 = arith.addf %231, %232 : vector<8x128xf32>
    %234 = arith.mulf %233, %220 : vector<8x128xf32>
    %235 = arith.mulf %234, %208 : vector<8x128xf32>
    %cst_74 = arith.constant 1.000000e+00 : f32
    %236 = vector.broadcast %cst_74 : f32 to vector<8x128xf32>
    %237 = arith.subf %236, %235 : vector<8x128xf32>
    %cst_75 = arith.constant 0.000000e+00 : f32
    %238 = vector.broadcast %cst_75 : f32 to vector<8x128xf32>
    %239 = arith.cmpf olt, %204, %238 : vector<8x128xf32>
    %cst_76 = arith.constant 0.000000e+00 : f32
    %240 = vector.broadcast %cst_76 : f32 to vector<8x128xf32>
    %241 = arith.subf %240, %237 : vector<8x128xf32>
    %242 = arith.select %239, %241, %237 : vector<8x128xi1>, vector<8x128xf32>
    %243 = vector.broadcast %202 : vector<8x1xf32> to vector<8x128xf32>
    %244 = arith.mulf %208, %243 : vector<8x128xf32>
    %245 = arith.addf %198, %244 : vector<8x128xf32>
    %246 = vector.broadcast %202 : vector<8x1xf32> to vector<8x128xf32>
    %247 = arith.mulf %242, %246 : vector<8x128xf32>
    %248 = arith.addf %201, %247 : vector<8x128xf32>
    %c0_77 = arith.constant 0 : index
    %c5_78 = arith.constant 5 : index
    %249 = vector.load %arg4[%c0_77, %c5_78] : memref<8x8xf32, #tpu.memory_space<vmem>>, vector<8x1xf32>
    %250 = vector.broadcast %5 : f32 to vector<8x128xf32>
    %251 = arith.subf %11, %250 : vector<8x128xf32>
    %252 = arith.mulf %251, %251 : vector<8x128xf32>
    %cst_79 = arith.constant -5.000000e-03 : f32
    %253 = vector.broadcast %cst_79 : f32 to vector<8x128xf32>
    %254 = arith.mulf %252, %253 : vector<8x128xf32>
    %255 = math.exp %254 : vector<8x128xf32>
    %cst_80 = arith.constant 0.0707106814 : f32
    %256 = vector.broadcast %cst_80 : f32 to vector<8x128xf32>
    %257 = arith.mulf %251, %256 : vector<8x128xf32>
    %258 = math.absf %257 : vector<8x128xf32>
    %cst_81 = arith.constant 0.327591091 : f32
    %259 = vector.broadcast %cst_81 : f32 to vector<8x128xf32>
    %260 = arith.mulf %259, %258 : vector<8x128xf32>
    %cst_82 = arith.constant 1.000000e+00 : f32
    %261 = vector.broadcast %cst_82 : f32 to vector<8x128xf32>
    %262 = arith.addf %261, %260 : vector<8x128xf32>
    %263 = tpu.reciprocal %262 {approx = true} : vector<8x128xf32> -> vector<8x128xf32>
    %264 = arith.mulf %262, %263 : vector<8x128xf32>
    %cst_83 = arith.constant 2.000000e+00 : f32
    %265 = vector.broadcast %cst_83 : f32 to vector<8x128xf32>
    %266 = arith.subf %265, %264 : vector<8x128xf32>
    %267 = arith.mulf %263, %266 : vector<8x128xf32>
    %cst_84 = arith.constant 1.06140542 : f32
    %268 = vector.broadcast %cst_84 : f32 to vector<8x128xf32>
    %269 = arith.mulf %268, %267 : vector<8x128xf32>
    %cst_85 = arith.constant -1.45315206 : f32
    %270 = vector.broadcast %cst_85 : f32 to vector<8x128xf32>
    %271 = arith.addf %269, %270 : vector<8x128xf32>
    %272 = arith.mulf %271, %267 : vector<8x128xf32>
    %cst_86 = arith.constant 1.42141378 : f32
    %273 = vector.broadcast %cst_86 : f32 to vector<8x128xf32>
    %274 = arith.addf %272, %273 : vector<8x128xf32>
    %275 = arith.mulf %274, %267 : vector<8x128xf32>
    %cst_87 = arith.constant -0.284496725 : f32
    %276 = vector.broadcast %cst_87 : f32 to vector<8x128xf32>
    %277 = arith.addf %275, %276 : vector<8x128xf32>
    %278 = arith.mulf %277, %267 : vector<8x128xf32>
    %cst_88 = arith.constant 0.254829586 : f32
    %279 = vector.broadcast %cst_88 : f32 to vector<8x128xf32>
    %280 = arith.addf %278, %279 : vector<8x128xf32>
    %281 = arith.mulf %280, %267 : vector<8x128xf32>
    %282 = arith.mulf %281, %255 : vector<8x128xf32>
    %cst_89 = arith.constant 1.000000e+00 : f32
    %283 = vector.broadcast %cst_89 : f32 to vector<8x128xf32>
    %284 = arith.subf %283, %282 : vector<8x128xf32>
    %cst_90 = arith.constant 0.000000e+00 : f32
    %285 = vector.broadcast %cst_90 : f32 to vector<8x128xf32>
    %286 = arith.cmpf olt, %251, %285 : vector<8x128xf32>
    %cst_91 = arith.constant 0.000000e+00 : f32
    %287 = vector.broadcast %cst_91 : f32 to vector<8x128xf32>
    %288 = arith.subf %287, %284 : vector<8x128xf32>
    %289 = arith.select %286, %288, %284 : vector<8x128xi1>, vector<8x128xf32>
    %290 = vector.broadcast %249 : vector<8x1xf32> to vector<8x128xf32>
    %291 = arith.mulf %255, %290 : vector<8x128xf32>
    %292 = arith.addf %245, %291 : vector<8x128xf32>
    %293 = vector.broadcast %249 : vector<8x1xf32> to vector<8x128xf32>
    %294 = arith.mulf %289, %293 : vector<8x128xf32>
    %295 = arith.addf %248, %294 : vector<8x128xf32>
    %c0_92 = arith.constant 0 : index
    %c6_93 = arith.constant 6 : index
    %296 = vector.load %arg4[%c0_92, %c6_93] : memref<8x8xf32, #tpu.memory_space<vmem>>, vector<8x1xf32>
    %297 = vector.broadcast %6 : f32 to vector<8x128xf32>
    %298 = arith.subf %11, %297 : vector<8x128xf32>
    %299 = arith.mulf %298, %298 : vector<8x128xf32>
    %cst_94 = arith.constant -5.000000e-03 : f32
    %300 = vector.broadcast %cst_94 : f32 to vector<8x128xf32>
    %301 = arith.mulf %299, %300 : vector<8x128xf32>
    %302 = math.exp %301 : vector<8x128xf32>
    %cst_95 = arith.constant 0.0707106814 : f32
    %303 = vector.broadcast %cst_95 : f32 to vector<8x128xf32>
    %304 = arith.mulf %298, %303 : vector<8x128xf32>
    %305 = math.absf %304 : vector<8x128xf32>
    %cst_96 = arith.constant 0.327591091 : f32
    %306 = vector.broadcast %cst_96 : f32 to vector<8x128xf32>
    %307 = arith.mulf %306, %305 : vector<8x128xf32>
    %cst_97 = arith.constant 1.000000e+00 : f32
    %308 = vector.broadcast %cst_97 : f32 to vector<8x128xf32>
    %309 = arith.addf %308, %307 : vector<8x128xf32>
    %310 = tpu.reciprocal %309 {approx = true} : vector<8x128xf32> -> vector<8x128xf32>
    %311 = arith.mulf %309, %310 : vector<8x128xf32>
    %cst_98 = arith.constant 2.000000e+00 : f32
    %312 = vector.broadcast %cst_98 : f32 to vector<8x128xf32>
    %313 = arith.subf %312, %311 : vector<8x128xf32>
    %314 = arith.mulf %310, %313 : vector<8x128xf32>
    %cst_99 = arith.constant 1.06140542 : f32
    %315 = vector.broadcast %cst_99 : f32 to vector<8x128xf32>
    %316 = arith.mulf %315, %314 : vector<8x128xf32>
    %cst_100 = arith.constant -1.45315206 : f32
    %317 = vector.broadcast %cst_100 : f32 to vector<8x128xf32>
    %318 = arith.addf %316, %317 : vector<8x128xf32>
    %319 = arith.mulf %318, %314 : vector<8x128xf32>
    %cst_101 = arith.constant 1.42141378 : f32
    %320 = vector.broadcast %cst_101 : f32 to vector<8x128xf32>
    %321 = arith.addf %319, %320 : vector<8x128xf32>
    %322 = arith.mulf %321, %314 : vector<8x128xf32>
    %cst_102 = arith.constant -0.284496725 : f32
    %323 = vector.broadcast %cst_102 : f32 to vector<8x128xf32>
    %324 = arith.addf %322, %323 : vector<8x128xf32>
    %325 = arith.mulf %324, %314 : vector<8x128xf32>
    %cst_103 = arith.constant 0.254829586 : f32
    %326 = vector.broadcast %cst_103 : f32 to vector<8x128xf32>
    %327 = arith.addf %325, %326 : vector<8x128xf32>
    %328 = arith.mulf %327, %314 : vector<8x128xf32>
    %329 = arith.mulf %328, %302 : vector<8x128xf32>
    %cst_104 = arith.constant 1.000000e+00 : f32
    %330 = vector.broadcast %cst_104 : f32 to vector<8x128xf32>
    %331 = arith.subf %330, %329 : vector<8x128xf32>
    %cst_105 = arith.constant 0.000000e+00 : f32
    %332 = vector.broadcast %cst_105 : f32 to vector<8x128xf32>
    %333 = arith.cmpf olt, %298, %332 : vector<8x128xf32>
    %cst_106 = arith.constant 0.000000e+00 : f32
    %334 = vector.broadcast %cst_106 : f32 to vector<8x128xf32>
    %335 = arith.subf %334, %331 : vector<8x128xf32>
    %336 = arith.select %333, %335, %331 : vector<8x128xi1>, vector<8x128xf32>
    %337 = vector.broadcast %296 : vector<8x1xf32> to vector<8x128xf32>
    %338 = arith.mulf %302, %337 : vector<8x128xf32>
    %339 = arith.addf %292, %338 : vector<8x128xf32>
    %340 = vector.broadcast %296 : vector<8x1xf32> to vector<8x128xf32>
    %341 = arith.mulf %336, %340 : vector<8x128xf32>
    %342 = arith.addf %295, %341 : vector<8x128xf32>
    %c0_107 = arith.constant 0 : index
    %c7_108 = arith.constant 7 : index
    %343 = vector.load %arg4[%c0_107, %c7_108] : memref<8x8xf32, #tpu.memory_space<vmem>>, vector<8x1xf32>
    %344 = vector.broadcast %7 : f32 to vector<8x128xf32>
    %345 = arith.subf %11, %344 : vector<8x128xf32>
    %346 = arith.mulf %345, %345 : vector<8x128xf32>
    %cst_109 = arith.constant -5.000000e-03 : f32
    %347 = vector.broadcast %cst_109 : f32 to vector<8x128xf32>
    %348 = arith.mulf %346, %347 : vector<8x128xf32>
    %349 = math.exp %348 : vector<8x128xf32>
    %cst_110 = arith.constant 0.0707106814 : f32
    %350 = vector.broadcast %cst_110 : f32 to vector<8x128xf32>
    %351 = arith.mulf %345, %350 : vector<8x128xf32>
    %352 = math.absf %351 : vector<8x128xf32>
    %cst_111 = arith.constant 0.327591091 : f32
    %353 = vector.broadcast %cst_111 : f32 to vector<8x128xf32>
    %354 = arith.mulf %353, %352 : vector<8x128xf32>
    %cst_112 = arith.constant 1.000000e+00 : f32
    %355 = vector.broadcast %cst_112 : f32 to vector<8x128xf32>
    %356 = arith.addf %355, %354 : vector<8x128xf32>
    %357 = tpu.reciprocal %356 {approx = true} : vector<8x128xf32> -> vector<8x128xf32>
    %358 = arith.mulf %356, %357 : vector<8x128xf32>
    %cst_113 = arith.constant 2.000000e+00 : f32
    %359 = vector.broadcast %cst_113 : f32 to vector<8x128xf32>
    %360 = arith.subf %359, %358 : vector<8x128xf32>
    %361 = arith.mulf %357, %360 : vector<8x128xf32>
    %cst_114 = arith.constant 1.06140542 : f32
    %362 = vector.broadcast %cst_114 : f32 to vector<8x128xf32>
    %363 = arith.mulf %362, %361 : vector<8x128xf32>
    %cst_115 = arith.constant -1.45315206 : f32
    %364 = vector.broadcast %cst_115 : f32 to vector<8x128xf32>
    %365 = arith.addf %363, %364 : vector<8x128xf32>
    %366 = arith.mulf %365, %361 : vector<8x128xf32>
    %cst_116 = arith.constant 1.42141378 : f32
    %367 = vector.broadcast %cst_116 : f32 to vector<8x128xf32>
    %368 = arith.addf %366, %367 : vector<8x128xf32>
    %369 = arith.mulf %368, %361 : vector<8x128xf32>
    %cst_117 = arith.constant -0.284496725 : f32
    %370 = vector.broadcast %cst_117 : f32 to vector<8x128xf32>
    %371 = arith.addf %369, %370 : vector<8x128xf32>
    %372 = arith.mulf %371, %361 : vector<8x128xf32>
    %cst_118 = arith.constant 0.254829586 : f32
    %373 = vector.broadcast %cst_118 : f32 to vector<8x128xf32>
    %374 = arith.addf %372, %373 : vector<8x128xf32>
    %375 = arith.mulf %374, %361 : vector<8x128xf32>
    %376 = arith.mulf %375, %349 : vector<8x128xf32>
    %cst_119 = arith.constant 1.000000e+00 : f32
    %377 = vector.broadcast %cst_119 : f32 to vector<8x128xf32>
    %378 = arith.subf %377, %376 : vector<8x128xf32>
    %cst_120 = arith.constant 0.000000e+00 : f32
    %379 = vector.broadcast %cst_120 : f32 to vector<8x128xf32>
    %380 = arith.cmpf olt, %345, %379 : vector<8x128xf32>
    %cst_121 = arith.constant 0.000000e+00 : f32
    %381 = vector.broadcast %cst_121 : f32 to vector<8x128xf32>
    %382 = arith.subf %381, %378 : vector<8x128xf32>
    %383 = arith.select %380, %382, %378 : vector<8x128xi1>, vector<8x128xf32>
    %384 = vector.broadcast %343 : vector<8x1xf32> to vector<8x128xf32>
    %385 = arith.mulf %349, %384 : vector<8x128xf32>
    %386 = arith.addf %339, %385 : vector<8x128xf32>
    %387 = vector.broadcast %343 : vector<8x1xf32> to vector<8x128xf32>
    %388 = arith.mulf %383, %387 : vector<8x128xf32>
    %389 = arith.addf %342, %388 : vector<8x128xf32>
    %c0_122 = arith.constant 0 : index
    %390 = arith.index_cast %9 : i32 to index
    %391 = vector.load %arg5[%c0_122, %390] : memref<8x128xf32, #tpu.memory_space<vmem>>, vector<8x128xf32>
    tpu.vector_store %arg5[%c0_122, %390], %386 {strides = array<i32>} : memref<8x128xf32, #tpu.memory_space<vmem>>, vector<8x128xf32>,
    %cst_123 = arith.constant 12.5331411 : f32
    %392 = vector.broadcast %cst_123 : f32 to vector<8x128xf32>
    %393 = arith.mulf %389, %392 : vector<8x128xf32>
    %c0_124 = arith.constant 0 : index
    %394 = arith.index_cast %9 : i32 to index
    %395 = vector.load %arg6[%c0_124, %394] : memref<8x128xf32, #tpu.memory_space<vmem>>, vector<8x128xf32>
    tpu.vector_store %arg6[%c0_124, %394], %393 {strides = array<i32>} : memref<8x128xf32, #tpu.memory_space<vmem>>, vector<8x128xf32>,
    %c1_i32 = arith.constant 1 : i32
    return
  }
  func.func @transform_0(%arg0: i32, %arg1: i32) -> i32 {
    %c0_i32 = arith.constant 0 : i32
    %c0_i32_0 = arith.constant 0 : i32
    return %c0_i32 : i32
  }
  func.func @transform_1(%arg0: i32, %arg1: i32) -> (i32, i32) {
    %c0_i32 = arith.constant 0 : i32
    return %arg0, %arg1 : i32, i32
  }
  func.func @transform_2(%arg0: i32, %arg1: i32) -> (i32, i32) {
    %c0_i32 = arith.constant 0 : i32
    %c0_i32_0 = arith.constant 0 : i32
    return %arg0, %c0_i32 : i32, i32
  }
  func.func @transform_3(%arg0: i32, %arg1: i32) -> (i32, i32) {
    %c0_i32 = arith.constant 0 : i32
    return %arg0, %arg1 : i32, i32
  }
  func.func @transform_4(%arg0: i32, %arg1: i32) -> (i32, i32) {
    %c0_i32 = arith.constant 0 : i32
    return %arg0, %arg1 : i32, i32
  }
}

</mosaic_0001>

<llo_original>
// kernel: tpu_custom_call.1
$region0: #{tpu_custom_call.1}
  #allocation0 [shape = 'u32[]', space=smem, size = 0x4, offset = 0x4, fixed_abs, tag = 'smem constant byte address 0x4 - core index']
  #allocation1 [shape = 'u32[144,128]{1,0:T(1,128)}', space=vmem, size = 0x12000, scoped, tag = 'internal scratch']
  %s0 = inlined_call_operand.hbm [shape: f32[8], index: 0, kind: input, shape index: {}]
  %s1 = inlined_call_operand.hbm [shape: f32[8,256], index: 1, kind: input, shape index: {}]
  %s2 = inlined_call_operand.hbm [shape: f32[8,8], index: 2, kind: input, shape index: {}]
  %s3 = inlined_call_operand.hbm [shape: f32[8,256], index: 3, kind: output, shape index: {0}]
  %s4 = inlined_call_operand.hbm [shape: f32[8,256], index: 4, kind: output, shape index: {1}]
  %5 = xla_tuple %s3, %s4
  %s6 = sld [smem:[#allocation0]]
  $region65: #{tpu_custom_call.1} parent=0
    _
  %s8 = ssub.s32 1, %s6
  %s9 = scalar_select 0, %s8, %s6
  $region1: #{tpu_custom_call.1} parent=0
    #allocation2 [shape = 'u8[512]{0}', space=smem, size = 0x200, scoped, tag = 'input window, operand 0, single buffered']
    #allocation3 [shape = 's32[2]{0}', space=sflag, size = 0x8, scoped, tag = 'scoped memory for tpu_custom_call.1']
    #allocation4 [shape = 's32[2]{0}', space=sflag, size = 0x8, scoped, tag = 'scoped memory for tpu_custom_call.1']
    #allocation5 [shape = 's32[2]{0}', space=sflag, size = 0x8, scoped, tag = 'scoped memory for tpu_custom_call.1']
    #allocation6 [shape = 'u8[8192]{0}', space=vmem, size = 0x2000, scoped, tag = 'input window, operand 1']
    #allocation7 [shape = 'u8[4096]{0}', space=vmem, size = 0x1000, scoped, tag = 'input window, operand 2, single buffered']
    #allocation8 [shape = 's32[1]{0}', space=sflag, size = 0x4, scoped, tag = 'scoped memory for tpu_custom_call.1']
    #allocation9 [shape = 'u8[8192]{0}', space=vmem, size = 0x2000, scoped, tag = 'output window, operand 0']
    #allocation10 [shape = 'u8[8192]{0}', space=vmem, size = 0x2000, scoped, tag = 'output window, operand 1']
    #allocation11 [shape = 's32[2]{0}', space=sflag, size = 0x8, scoped, tag = 'scoped memory for tpu_custom_call.1']
    %10 = vsyncpa [#allocation5], 0
    %11 = vsyncpa [#allocation3], 0
    %s12 = scalar_lea.sflag [#allocation3], 1
    %13 = vsyncpa %s12, 0
    %14 = vsyncpa [#allocation8], 0
    %15 = vsyncpa [#allocation4], 0
    %s16 = scalar_lea.sflag [#allocation4], 1
    %17 = vsyncpa %s16, 0
    %18 = vsyncpa [#allocation11], 0
    %s19 = scalar_lea.sflag [#allocation11], 1
    %20 = vsyncpa %s19, 0
    loop: start=0, step=1, limit=4
    $region2: #{tpu_custom_call.1} parent=1 // loop_pre_header
      _
    $region3: #{tpu_custom_call.1} parent=1 // loop_header
      %s22 = sphi 0, %s26
      %p23 = scmp.ge.s32.totalorder %s22, 4
      %s29 = sphi 0, %s41
      %s30 = sphi 0, %s37
      %s31 = sphi 0, %s29
      %s32 = sphi 0, %s30
      %s33 = sphi 0, %s31
      %s34 = sphi 0, %s32
      %s42 = sphi 0, %s42
      %s44 = sphi 0, %s42
      %s45 = sphi 0, %s44
      %s59 = sphi 0, %s45
      %s67 = sphi 0, %s69
      %s70 = sphi 0, %s67
      %s71 = sphi 0, %s70
      %s87 = sphi 0, %s71
      %s93 = sphi 0, %s95
      %s96 = sphi 0, %s93
      %s97 = sphi 0, %s96
      %s113 = sphi 0, %s97
      %s121 = sphi 0, %s123
      %s124 = sphi 0, %s121
      %s125 = sphi 0, %s124
      %s141 = sphi 0, %s125
      %s149 = sphi 0, %s151
      %s152 = sphi 0, %s149
      %s153 = sphi 0, %s152
      %s169 = sphi 0, %s153
    $region4: #{tpu_custom_call.1} parent=1 // loop_header_branch
      %25 = sbr.rel (%p23) target = $region8
    $region5: #{tpu_custom_call.1} parent=1 // loop_body
      %s27 = ssub.s32 %s22, 1
      %s28 = ssub.s32 %s22, 2
      %s35 = sadd.s32 1, %s30
      %p36 = scmp.ge.s32.totalorder %s35, 2
      %s37 = scalar_select %p36, 0, %s35
      %s38 = sadd.s32 1, %s29
      %s39 = scalar_select %p36, %s38, %s29
      %p40 = scmp.ge.s32.totalorder %s39, 1
      %s41 = scalar_select %p40, 0, %s39
      %s43 = sadd.s32 %s42, 1
      %p46 = scmp.eq.s32.totalorder %s22, 1
      %p47 = scmp.ne.s32.totalorder %s42, %s44
      %p48 = scmp.eq.s32.totalorder %s22, 0
      %p49 = por %p47, %p48
      %p50 = scmp.ne.s32.totalorder %s42, %s44
      %p51 = scmp.eq.s32.totalorder %s27, 1
      %p52 = por %p50, %p51
      %p53 = scmp.ne.s32.totalorder %s44, %s45
      %p54 = scmp.eq.s32.totalorder %s27, 0
      %p55 = por %p53, %p54
      %p56 = scmp.ne.s32.totalorder %s44, %s45
      %p57 = scmp.eq.s32.totalorder %s28, 1
      %p58 = por %p56, %p57
      %p60 = scmp.ne.s32.totalorder %s45, %s59
      %p61 = scmp.eq.s32.totalorder %s28, 0
      %p62 = por %p60, %p61
      %s63 = ssub.s32 %s29, %s41
      %s64 = ssub.s32 %s30, %s37
      %s65 = sor.u32 %s63, %s64
      %p66 = scmp.eq.s32.totalorder %s65, 0
      %s68 = sadd.s32 %s67, 1
      %s69 = scalar_select %p66, %s67, %s68
      %p72 = pneg %p66
      %p73 = scmp.eq.s32.totalorder %s22, 1
      %p74 = por %p72, %p73
      %p75 = scmp.ne.s32.totalorder %s67, %s70
      %p76 = scmp.eq.s32.totalorder %s22, 0
      %p77 = por %p75, %p76
      %p78 = scmp.ne.s32.totalorder %s67, %s70
      %p79 = scmp.eq.s32.totalorder %s27, 1
      %p80 = por %p78, %p79
      %p81 = scmp.ne.s32.totalorder %s70, %s71
      %p82 = scmp.eq.s32.totalorder %s27, 0
      %p83 = por %p81, %p82
      %p84 = scmp.ne.s32.totalorder %s70, %s71
      %p85 = scmp.eq.s32.totalorder %s28, 1
      %p86 = por %p84, %p85
      %p88 = scmp.ne.s32.totalorder %s71, %s87
      %p89 = scmp.eq.s32.totalorder %s28, 0
      %p90 = por %p88, %p89
      %s91 = ssub.s32 %s29, %s41
      %p92 = scmp.eq.s32.totalorder %s91, 0
      %s94 = sadd.s32 %s93, 1
      %s95 = scalar_select %p92, %s93, %s94
      %p98 = pneg %p92
      %p99 = scmp.eq.s32.totalorder %s22, 1
      %p100 = por %p98, %p99
      %p101 = scmp.ne.s32.totalorder %s93, %s96
      %p102 = scmp.eq.s32.totalorder %s22, 0
      %p103 = por %p101, %p102
      %p104 = scmp.ne.s32.totalorder %s93, %s96
      %p105 = scmp.eq.s32.totalorder %s27, 1
      %p106 = por %p104, %p105
      %p107 = scmp.ne.s32.totalorder %s96, %s97
      %p108 = scmp.eq.s32.totalorder %s27, 0
      %p109 = por %p107, %p108
      %p110 = scmp.ne.s32.totalorder %s96, %s97
      %p111 = scmp.eq.s32.totalorder %s28, 1
      %p112 = por %p110, %p111
      %p114 = scmp.ne.s32.totalorder %s97, %s113
      %p115 = scmp.eq.s32.totalorder %s28, 0
      %p116 = por %p114, %p115
      %s117 = ssub.s32 %s29, %s41
      %s118 = ssub.s32 %s30, %s37
      %s119 = sor.u32 %s117, %s118
      %p120 = scmp.eq.s32.totalorder %s119, 0
      %s122 = sadd.s32 %s121, 1
      %s123 = scalar_select %p120, %s121, %s122
      %p126 = pneg %p120
      %p127 = scmp.eq.s32.totalorder %s22, 1
      %p128 = por %p126, %p127
      %p129 = scmp.ne.s32.totalorder %s121, %s124
      %p130 = scmp.eq.s32.totalorder %s22, 0
      %p131 = por %p129, %p130
      %p132 = scmp.ne.s32.totalorder %s121, %s124
      %p133 = scmp.eq.s32.totalorder %s27, 1
      %p134 = por %p132, %p133
      %p135 = scmp.ne.s32.totalorder %s124, %s125
      %p136 = scmp.eq.s32.totalorder %s27, 0
      %p137 = por %p135, %p136
      %p138 = scmp.ne.s32.totalorder %s124, %s125
      %p139 = scmp.eq.s32.totalorder %s28, 1
      %p140 = por %p138, %p139
      %p142 = scmp.ne.s32.totalorder %s125, %s141
      %p143 = scmp.eq.s32.totalorder %s28, 0
      %p144 = por %p142, %p143
      %s145 = ssub.s32 %s29, %s41
      %s146 = ssub.s32 %s30, %s37
      %s147 = sor.u32 %s145, %s146
      %p148 = scmp.eq.s32.totalorder %s147, 0
      %s150 = sadd.s32 %s149, 1
      %s151 = scalar_select %p148, %s149, %s150
      %p154 = pneg %p148
      %p155 = scmp.eq.s32.totalorder %s22, 1
      %p156 = por %p154, %p155
      %p157 = scmp.ne.s32.totalorder %s149, %s152
      %p158 = scmp.eq.s32.totalorder %s22, 0
      %p159 = por %p157, %p158
      %p160 = scmp.ne.s32.totalorder %s149, %s152
      %p161 = scmp.eq.s32.totalorder %s27, 1
      %p162 = por %p160, %p161
      %p163 = scmp.ne.s32.totalorder %s152, %s153
      %p164 = scmp.eq.s32.totalorder %s27, 0
      %p165 = por %p163, %p164
      %p166 = scmp.ne.s32.totalorder %s152, %s153
      %p167 = scmp.eq.s32.totalorder %s28, 1
      %p168 = por %p166, %p167
      %p170 = scmp.ne.s32.totalorder %s153, %s169
      %p171 = scmp.eq.s32.totalorder %s28, 0
      %p172 = por %p170, %p171
      %p173 = scmp.le.s32.totalorder 1, %s22
      %p174 = scmp.lt.s32.totalorder %s22, 3
      %p175 = pnand %p173, %p174
      %p176 = pneg %p175
      // Predicated region
      $region9: #{tpu_custom_call.1} parent=5 // pred_check
        _
      $region10: #{tpu_custom_call.1} parent=5 // pred_check_branch
        %178 = sbr.rel (%p175) target = $region12
      $region11: #{tpu_custom_call.1} parent=5 // pred_region
        %s179 = ssub.s32 %s22, 1
        // Predicated region
        $region13: #{tpu_custom_call.1} parent=11 // pred_check
          %p180 = pneg %p55
        $region14: #{tpu_custom_call.1} parent=11 // pred_check_branch
          %182 = sbr.rel (%p180) target = $region16
        $region15: #{tpu_custom_call.1} parent=11 // pred_region
          %s184 = ssub.s32 16, 16
          %185 = vsyncadd [#allocation5], %s184
          %188 = dma.hbm_to_smem %s0, 16, [#allocation2], [#allocation5]
        $region16: #{tpu_custom_call.1} parent=11 // pred_fallthru
          _
        // Predicated region
        $region17: #{tpu_custom_call.1} parent=11 // pred_check
          %p189 = pneg %p109
        $region18: #{tpu_custom_call.1} parent=11 // pred_check_branch
          %191 = sbr.rel (%p189) target = $region20
        $region19: #{tpu_custom_call.1} parent=11 // pred_region
          %s193 = ssub.s32 128, 128
          %194 = vsyncadd [#allocation8], %s193
          %s195 = smul.addr %s31, 128
          %s196 = scalar_lea.hbm %s2, %s195
          %s198 = sshll.u32 [#allocation7], 4
          %s199 = int_to_ptr.vmem [resolvable:$true] %s198
          %201 = dma.hbm_to_vmem [thread:$0]  %s196, 128, %s199, [#allocation8]
        $region20: #{tpu_custom_call.1} parent=11 // pred_fallthru
          _
      $region12: #{tpu_custom_call.1} parent=5 // pred_fallthru
        _
      %p202 = scmp.lt.s32.totalorder %s22, 2
      // Predicated region
      $region21: #{tpu_custom_call.1} parent=5 // pred_check
        %p203 = pneg %p202
      $region22: #{tpu_custom_call.1} parent=5 // pred_check_branch
        %205 = sbr.rel (%p203) target = $region24
      $region23: #{tpu_custom_call.1} parent=5 // pred_region
        // Predicated region
        $region25: #{tpu_custom_call.1} parent=23 // pred_check
          %p206 = pneg %p77
        $region26: #{tpu_custom_call.1} parent=23 // pred_check_branch
          %208 = sbr.rel (%p206) target = $region28
        $region27: #{tpu_custom_call.1} parent=23 // pred_region
          %s209 = sand.u32 %s67, 1
          %s210 = scalar_lea.sflag [#allocation3], %s209
          %s211 = sand.u32 %s67, 1
          %s212 = smul.addr %s211, 8
          %s213 = scalar_lea.vmem [#allocation6], %s212
          %s215 = ssub.s32 128, 128
          %216 = vsyncadd %s210, %s215
          %s217 = smul.addr %s29, 2
          %s218 = sadd.s32 %s30, %s217
          %s219 = smul.addr %s218, 128
          %s220 = scalar_lea.hbm %s1, %s219
          %s222 = sshll.u32 %s213, 4
          %s223 = int_to_ptr.vmem [resolvable:$true] %s222
          %225 = dma.hbm_to_vmem [thread:$0]  %s220, 128, %s223, %s210
        $region28: #{tpu_custom_call.1} parent=23 // pred_fallthru
          _
      $region24: #{tpu_custom_call.1} parent=5 // pred_fallthru
        _
      %p226 = scmp.le.s32.totalorder 1, %s22
      %p227 = scmp.lt.s32.totalorder %s22, 3
      %p228 = pnand %p226, %p227
      %p229 = pneg %p228
      // Predicated region
      $region29: #{tpu_custom_call.1} parent=5 // pred_check
        _
      $region30: #{tpu_custom_call.1} parent=5 // pred_check_branch
        %231 = sbr.rel (%p228) target = $region32
      $region31: #{tpu_custom_call.1} parent=5 // pred_region
        %s232 = ssub.s32 %s22, 1
        // Predicated region
        $region33: #{tpu_custom_call.1} parent=31 // pred_check
          %p233 = pneg %p55
        $region34: #{tpu_custom_call.1} parent=31 // pred_check_branch
          %235 = sbr.rel (%p233) target = $region36
        $region35: #{tpu_custom_call.1} parent=31 // pred_region
          %236 = dma.done [#allocation5], 16
        $region36: #{tpu_custom_call.1} parent=31 // pred_fallthru
          _
        %s237 = sand.u32 %s70, 1
        %s238 = scalar_lea.sflag [#allocation3], %s237
        %s239 = sand.u32 %s70, 1
        %s240 = smul.addr %s239, 8
        %s241 = scalar_lea.vmem [#allocation6], %s240
        // Predicated region
        $region37: #{tpu_custom_call.1} parent=31 // pred_check
          %p242 = pneg %p83
        $region38: #{tpu_custom_call.1} parent=31 // pred_check_branch
          %244 = sbr.rel (%p242) target = $region40
        $region39: #{tpu_custom_call.1} parent=31 // pred_region
          %245 = dma.done %s238, 128
        $region40: #{tpu_custom_call.1} parent=31 // pred_fallthru
          _
        // Predicated region
        $region41: #{tpu_custom_call.1} parent=31 // pred_check
          %p246 = pneg %p109
        $region42: #{tpu_custom_call.1} parent=31 // pred_check_branch
          %248 = sbr.rel (%p246) target = $region44
        $region43: #{tpu_custom_call.1} parent=31 // pred_region
          %249 = dma.done [#allocation8], 128
        $region44: #{tpu_custom_call.1} parent=31 // pred_fallthru
          _
        %250 = sfence
        %p251 = pneg %p55
        %p252 = pneg %p52
        %s253 = sand.u32 %s70, 1
        %s254 = scalar_lea.sflag [#allocation3], %s253
        %s255 = sand.u32 %s70, 1
        %s256 = smul.addr %s255, 8
        %s257 = scalar_lea.vmem [#allocation6], %s256
        %p258 = pneg %p83
        %p259 = pneg %p80
        %p260 = pneg %p109
        %p261 = pneg %p106
        %p262 = pneg %p137
        %p263 = pneg %p134
        %s264 = sand.u32 %s124, 1
        %s265 = scalar_lea.sflag [#allocation4], %s264
        %s266 = sand.u32 %s124, 1
        %s267 = smul.addr %s266, 8
        %s268 = scalar_lea.vmem [#allocation9], %s267
        %p269 = pneg %p165
        %p270 = pneg %p162
        %s271 = sand.u32 %s152, 1
        %s272 = scalar_lea.sflag [#allocation11], %s271
        %s273 = sand.u32 %s152, 1
        %s274 = smul.addr %s273, 8
        %s275 = scalar_lea.vmem [#allocation10], %s274
        %s276 = sld [smem:[#allocation2]]
        %s277 = sld [smem:[#allocation2 + $0x1]]
        %s278 = sld [smem:[#allocation2 + $0x2]]
        %s279 = sld [smem:[#allocation2 + $0x3]]
        %s280 = sld [smem:[#allocation2 + $0x4]]
        %s281 = sld [smem:[#allocation2 + $0x5]]
        %s282 = sld [smem:[#allocation2 + $0x6]]
        %s283 = sld [smem:[#allocation2 + $0x7]]
        %v284 = vld [vmem:[%s241] sm:$0xff]
        %v285 = vld [vmem:[#allocation7] sm:$0xff]
        %v286 = vstv %s276
        %v287 = vsub.f32 %v284, %v286
        %v288 = vmul.f32 %v287, %v287
        %v289 = vmul.f32 %v288, -0.005
        %v290 = vmul.f32 %v289, 1.442695
        %v291 = vpow.pop %v290
        %v292 = vmul.f32 %v287, 0.07071068
        %v293 = vand.u32 2147483647, %v292
        %v294 = vmul.f32 %v293, 0.3275911
        %v295 = vadd.f32 %v294, 1.0
        %v296 = vrcp.pop %v295
        %v297 = vmul.f32 %v295, %v296
        %v298 = vsub.f32 2.0, %v297
        %v299 = vmul.f32 %v296, %v298
        %v300 = vmul.f32 %v299, 1.0614054
        %v301 = vadd.f32 %v300, -1.4531521
        %v302 = vmul.f32 %v301, %v299
        %v303 = vadd.f32 %v302, 1.4214138
        %v304 = vmul.f32 %v303, %v299
        %v305 = vadd.f32 %v304, -0.28449672
        %v306 = vmul.f32 %v305, %v299
        %v307 = vadd.f32 %v306, 0.2548296
        %v308 = vmul.f32 %v307, %v299
        %v309 = vmul.f32 %v308, %v291
        %v310 = vsub.f32 1.0, %v309
        %vm311 = vcmp.lt.f32.partialorder %v287, 0.0
        %v312 = vsub.f32 0.0, %v310
        %v313 = vsel %vm311, %v312, %v310
        %315 = vset.pattern.permute.xlu0 0
        %316 = vperm.xlu0 %315, %v285
        %v317 = vpop.permute.xlu0 %316
        %v319 = vmul.f32 %v291, %v317
        %v320 = vadd.f32 %v319, 0.0
        %v321 = vmul.f32 %v313, %v317
        %v322 = vadd.f32 %v321, 0.0
        %v323 = vstv %s277
        %v324 = vsub.f32 %v284, %v323
        %v325 = vmul.f32 %v324, %v324
        %v326 = vmul.f32 %v325, -0.005
        %v327 = vmul.f32 %v326, 1.442695
        %v328 = vpow.pop %v327
        %v329 = vmul.f32 %v324, 0.07071068
        %v330 = vand.u32 2147483647, %v329
        %v331 = vmul.f32 %v330, 0.3275911
        %v332 = vadd.f32 %v331, 1.0
        %v333 = vrcp.pop %v332
        %v334 = vmul.f32 %v332, %v333
        %v335 = vsub.f32 2.0, %v334
        %v336 = vmul.f32 %v333, %v335
        %v337 = vmul.f32 %v336, 1.0614054
        %v338 = vadd.f32 %v337, -1.4531521
        %v339 = vmul.f32 %v338, %v336
        %v340 = vadd.f32 %v339, 1.4214138
        %v341 = vmul.f32 %v340, %v336
        %v342 = vadd.f32 %v341, -0.28449672
        %v343 = vmul.f32 %v342, %v336
        %v344 = vadd.f32 %v343, 0.2548296
        %v345 = vmul.f32 %v344, %v336
        %v346 = vmul.f32 %v345, %v328
        %v347 = vsub.f32 1.0, %v346
        %vm348 = vcmp.lt.f32.partialorder %v324, 0.0
        %v349 = vsub.f32 0.0, %v347
        %v350 = vsel %vm348, %v349, %v347
        %351 = vset.pattern.permute.xlu0 1
        %352 = vperm.xlu0 %351, %v285
        %v353 = vpop.permute.xlu0 %352
        %v355 = vmul.f32 %v328, %v353
        %v356 = vadd.f32 %v320, %v355
        %v357 = vmul.f32 %v350, %v353
        %v358 = vadd.f32 %v322, %v357
        %v359 = vstv %s278
        %v360 = vsub.f32 %v284, %v359
        %v361 = vmul.f32 %v360, %v360
        %v362 = vmul.f32 %v361, -0.005
        %v363 = vmul.f32 %v362, 1.442695
        %v364 = vpow.pop %v363
        %v365 = vmul.f32 %v360, 0.07071068
        %v366 = vand.u32 2147483647, %v365
        %v367 = vmul.f32 %v366, 0.3275911
        %v368 = vadd.f32 %v367, 1.0
        %v369 = vrcp.pop %v368
        %v370 = vmul.f32 %v368, %v369
        %v371 = vsub.f32 2.0, %v370
        %v372 = vmul.f32 %v369, %v371
        %v373 = vmul.f32 %v372, 1.0614054
        %v374 = vadd.f32 %v373, -1.4531521
        %v375 = vmul.f32 %v374, %v372
        %v376 = vadd.f32 %v375, 1.4214138
        %v377 = vmul.f32 %v376, %v372
        %v378 = vadd.f32 %v377, -0.28449672
        %v379 = vmul.f32 %v378, %v372
        %v380 = vadd.f32 %v379, 0.2548296
        %v381 = vmul.f32 %v380, %v372
        %v382 = vmul.f32 %v381, %v364
        %v383 = vsub.f32 1.0, %v382
        %vm384 = vcmp.lt.f32.partialorder %v360, 0.0
        %v385 = vsub.f32 0.0, %v383
        %v386 = vsel %vm384, %v385, %v383
        %387 = vset.pattern.permute.xlu0 2
        %388 = vperm.xlu0 %387, %v285
        %v389 = vpop.permute.xlu0 %388
        %v391 = vmul.f32 %v364, %v389
        %v392 = vadd.f32 %v356, %v391
        %v393 = vmul.f32 %v386, %v389
        %v394 = vadd.f32 %v358, %v393
        %v395 = vstv %s279
        %v396 = vsub.f32 %v284, %v395
        %v397 = vmul.f32 %v396, %v396
        %v398 = vmul.f32 %v397, -0.005
        %v399 = vmul.f32 %v398, 1.442695
        %v400 = vpow.pop %v399
        %v401 = vmul.f32 %v396, 0.07071068
        %v402 = vand.u32 2147483647, %v401
        %v403 = vmul.f32 %v402, 0.3275911
        %v404 = vadd.f32 %v403, 1.0
        %v405 = vrcp.pop %v404
        %v406 = vmul.f32 %v404, %v405
        %v407 = vsub.f32 2.0, %v406
        %v408 = vmul.f32 %v405, %v407
        %v409 = vmul.f32 %v408, 1.0614054
        %v410 = vadd.f32 %v409, -1.4531521
        %v411 = vmul.f32 %v410, %v408
        %v412 = vadd.f32 %v411, 1.4214138
        %v413 = vmul.f32 %v412, %v408
        %v414 = vadd.f32 %v413, -0.28449672
        %v415 = vmul.f32 %v414, %v408
        %v416 = vadd.f32 %v415, 0.2548296
        %v417 = vmul.f32 %v416, %v408
        %v418 = vmul.f32 %v417, %v400
        %v419 = vsub.f32 1.0, %v418
        %vm420 = vcmp.lt.f32.partialorder %v396, 0.0
        %v421 = vsub.f32 0.0, %v419
        %v422 = vsel %vm420, %v421, %v419
        %423 = vset.pattern.permute.xlu0 3
        %424 = vperm.xlu0 %423, %v285
        %v425 = vpop.permute.xlu0 %424
        %v427 = vmul.f32 %v400, %v425
        %v428 = vadd.f32 %v392, %v427
        %v429 = vmul.f32 %v422, %v425
        %v430 = vadd.f32 %v394, %v429
        %v431 = vstv %s280
        %v432 = vsub.f32 %v284, %v431
        %v433 = vmul.f32 %v432, %v432
        %v434 = vmul.f32 %v433, -0.005
        %v435 = vmul.f32 %v434, 1.442695
        %v436 = vpow.pop %v435
        %v437 = vmul.f32 %v432, 0.07071068
        %v438 = vand.u32 2147483647, %v437
        %v439 = vmul.f32 %v438, 0.3275911
        %v440 = vadd.f32 %v439, 1.0
        %v441 = vrcp.pop %v440
        %v442 = vmul.f32 %v440, %v441
        %v443 = vsub.f32 2.0, %v442
        %v444 = vmul.f32 %v441, %v443
        %v445 = vmul.f32 %v444, 1.0614054
        %v446 = vadd.f32 %v445, -1.4531521
        %v447 = vmul.f32 %v446, %v444
        %v448 = vadd.f32 %v447, 1.4214138
        %v449 = vmul.f32 %v448, %v444
        %v450 = vadd.f32 %v449, -0.28449672
        %v451 = vmul.f32 %v450, %v444
        %v452 = vadd.f32 %v451, 0.2548296
        %v453 = vmul.f32 %v452, %v444
        %v454 = vmul.f32 %v453, %v436
        %v455 = vsub.f32 1.0, %v454
        %vm456 = vcmp.lt.f32.partialorder %v432, 0.0
        %v457 = vsub.f32 0.0, %v455
        %v458 = vsel %vm456, %v457, %v455
        %459 = vset.pattern.permute.xlu0 4
        %460 = vperm.xlu0 %459, %v285
        %v461 = vpop.permute.xlu0 %460
        %v463 = vmul.f32 %v436, %v461
        %v464 = vadd.f32 %v428, %v463
        %v465 = vmul.f32 %v458, %v461
        %v466 = vadd.f32 %v430, %v465
        %v467 = vstv %s281
        %v468 = vsub.f32 %v284, %v467
        %v469 = vmul.f32 %v468, %v468
        %v470 = vmul.f32 %v469, -0.005
        %v471 = vmul.f32 %v470, 1.442695
        %v472 = vpow.pop %v471
        %v473 = vmul.f32 %v468, 0.07071068
        %v474 = vand.u32 2147483647, %v473
        %v475 = vmul.f32 %v474, 0.3275911
        %v476 = vadd.f32 %v475, 1.0
        %v477 = vrcp.pop %v476
        %v478 = vmul.f32 %v476, %v477
        %v479 = vsub.f32 2.0, %v478
        %v480 = vmul.f32 %v477, %v479
        %v481 = vmul.f32 %v480, 1.0614054
        %v482 = vadd.f32 %v481, -1.4531521
        %v483 = vmul.f32 %v482, %v480
        %v484 = vadd.f32 %v483, 1.4214138
        %v485 = vmul.f32 %v484, %v480
        %v486 = vadd.f32 %v485, -0.28449672
        %v487 = vmul.f32 %v486, %v480
        %v488 = vadd.f32 %v487, 0.2548296
        %v489 = vmul.f32 %v488, %v480
        %v490 = vmul.f32 %v489, %v472
        %v491 = vsub.f32 1.0, %v490
        %vm492 = vcmp.lt.f32.partialorder %v468, 0.0
        %v493 = vsub.f32 0.0, %v491
        %v494 = vsel %vm492, %v493, %v491
        %495 = vset.pattern.permute.xlu0 5
        %496 = vperm.xlu0 %495, %v285
        %v497 = vpop.permute.xlu0 %496
        %v499 = vmul.f32 %v472, %v497
        %v500 = vadd.f32 %v464, %v499
        %v501 = vmul.f32 %v494, %v497
        %v502 = vadd.f32 %v466, %v501
        %v503 = vstv %s282
        %v504 = vsub.f32 %v284, %v503
        %v505 = vmul.f32 %v504, %v504
        %v506 = vmul.f32 %v505, -0.005
        %v507 = vmul.f32 %v506, 1.442695
        %v508 = vpow.pop %v507
        %v509 = vmul.f32 %v504, 0.07071068
        %v510 = vand.u32 2147483647, %v509
        %v511 = vmul.f32 %v510, 0.3275911
        %v512 = vadd.f32 %v511, 1.0
        %v513 = vrcp.pop %v512
        %v514 = vmul.f32 %v512, %v513
        %v515 = vsub.f32 2.0, %v514
        %v516 = vmul.f32 %v513, %v515
        %v517 = vmul.f32 %v516, 1.0614054
        %v518 = vadd.f32 %v517, -1.4531521
        %v519 = vmul.f32 %v518, %v516
        %v520 = vadd.f32 %v519, 1.4214138
        %v521 = vmul.f32 %v520, %v516
        %v522 = vadd.f32 %v521, -0.28449672
        %v523 = vmul.f32 %v522, %v516
        %v524 = vadd.f32 %v523, 0.2548296
        %v525 = vmul.f32 %v524, %v516
        %v526 = vmul.f32 %v525, %v508
        %v527 = vsub.f32 1.0, %v526
        %vm528 = vcmp.lt.f32.partialorder %v504, 0.0
        %v529 = vsub.f32 0.0, %v527
        %v530 = vsel %vm528, %v529, %v527
        %531 = vset.pattern.permute.xlu0 6
        %532 = vperm.xlu0 %531, %v285
        %v533 = vpop.permute.xlu0 %532
        %v535 = vmul.f32 %v508, %v533
        %v536 = vadd.f32 %v500, %v535
        %v537 = vmul.f32 %v530, %v533
        %v538 = vadd.f32 %v502, %v537
        %v539 = vstv %s283
        %v540 = vsub.f32 %v284, %v539
        %v541 = vmul.f32 %v540, %v540
        %v542 = vmul.f32 %v541, -0.005
        %v543 = vmul.f32 %v542, 1.442695
        %v544 = vpow.pop %v543
        %v545 = vmul.f32 %v540, 0.07071068
        %v546 = vand.u32 2147483647, %v545
        %v547 = vmul.f32 %v546, 0.3275911
        %v548 = vadd.f32 %v547, 1.0
        %v549 = vrcp.pop %v548
        %v550 = vmul.f32 %v548, %v549
        %v551 = vsub.f32 2.0, %v550
        %v552 = vmul.f32 %v549, %v551
        %v553 = vmul.f32 %v552, 1.0614054
        %v554 = vadd.f32 %v553, -1.4531521
        %v555 = vmul.f32 %v554, %v552
        %v556 = vadd.f32 %v555, 1.4214138
        %v557 = vmul.f32 %v556, %v552
        %v558 = vadd.f32 %v557, -0.28449672
        %v559 = vmul.f32 %v558, %v552
        %v560 = vadd.f32 %v559, 0.2548296
        %v561 = vmul.f32 %v560, %v552
        %v562 = vmul.f32 %v561, %v544
        %v563 = vsub.f32 1.0, %v562
        %vm564 = vcmp.lt.f32.partialorder %v540, 0.0
        %v565 = vsub.f32 0.0, %v563
        %v566 = vsel %vm564, %v565, %v563
        %567 = vset.pattern.permute.xlu0 7
        %568 = vperm.xlu0 %567, %v285
        %v569 = vpop.permute.xlu0 %568
        %v571 = vmul.f32 %v544, %v569
        %v572 = vadd.f32 %v536, %v571
        %v573 = vmul.f32 %v566, %v569
        %v574 = vadd.f32 %v538, %v573
        %575 = vst [vmem:[%s268] sm:$0xff] %v572
        %v576 = vmul.f32 %v574, 12.533141
        %577 = vst [vmem:[%s275] sm:$0xff] %v576
        %s578 = sand.u32 %s124, 1
        %s579 = scalar_lea.sflag [#allocation4], %s578
        %s580 = sand.u32 %s124, 1
        %s581 = smul.addr %s580, 8
        %s582 = scalar_lea.vmem [#allocation9], %s581
        %s583 = sand.u32 %s152, 1
        %s584 = scalar_lea.sflag [#allocation11], %s583
        %s585 = sand.u32 %s152, 1
        %s586 = smul.addr %s585, 8
        %s587 = scalar_lea.vmem [#allocation10], %s586
        // Predicated region
        $region45: #{tpu_custom_call.1} parent=31 // pred_check
          %p588 = pneg %p134
        $region46: #{tpu_custom_call.1} parent=31 // pred_check_branch
          %590 = sbr.rel (%p588) target = $region48
        $region47: #{tpu_custom_call.1} parent=31 // pred_region
          %s592 = ssub.s32 128, 128
          %593 = vsyncadd %s579, %s592
          %s594 = smul.addr %s31, 2
          %s595 = sadd.s32 %s32, %s594
          %s596 = smul.addr %s595, 128
          %s597 = scalar_lea.hbm %s3, %s596
          %s599 = sshll.u32 %s582, 4
          %s600 = int_to_ptr.vmem [resolvable:$true] %s599
          %602 = dma.vmem_to_hbm [thread:$0]  %s600, 128, %s597, %s579
        $region48: #{tpu_custom_call.1} parent=31 // pred_fallthru
          _
        // Predicated region
        $region49: #{tpu_custom_call.1} parent=31 // pred_check
          %p603 = pneg %p162
        $region50: #{tpu_custom_call.1} parent=31 // pred_check_branch
          %605 = sbr.rel (%p603) target = $region52
        $region51: #{tpu_custom_call.1} parent=31 // pred_region
          %s607 = ssub.s32 128, 128
          %608 = vsyncadd %s584, %s607
          %s609 = smul.addr %s31, 2
          %s610 = sadd.s32 %s32, %s609
          %s611 = smul.addr %s610, 128
          %s612 = scalar_lea.hbm %s4, %s611
          %s614 = sshll.u32 %s587, 4
          %s615 = int_to_ptr.vmem [resolvable:$true] %s614
          %617 = dma.vmem_to_hbm [thread:$0]  %s615, 128, %s612, %s584
        $region52: #{tpu_custom_call.1} parent=31 // pred_fallthru
          _
      $region32: #{tpu_custom_call.1} parent=5 // pred_fallthru
        _
      %p618 = scmp.le.s32.totalorder 2, %s22
      // Predicated region
      $region53: #{tpu_custom_call.1} parent=5 // pred_check
        %p619 = pneg %p618
      $region54: #{tpu_custom_call.1} parent=5 // pred_check_branch
        %621 = sbr.rel (%p619) target = $region56
      $region55: #{tpu_custom_call.1} parent=5 // pred_region
        %s622 = ssub.s32 %s22, 2
        // Predicated region
        $region57: #{tpu_custom_call.1} parent=55 // pred_check
          %p623 = pneg %p140
        $region58: #{tpu_custom_call.1} parent=55 // pred_check_branch
          %625 = sbr.rel (%p623) target = $region60
        $region59: #{tpu_custom_call.1} parent=55 // pred_region
          %s626 = sand.u32 %s125, 1
          %s627 = scalar_lea.sflag [#allocation4], %s626
          %s628 = sand.u32 %s125, 1
          %s629 = smul.addr %s628, 8
          %s630 = scalar_lea.vmem [#allocation9], %s629
          %631 = dma.done %s627, 128
        $region60: #{tpu_custom_call.1} parent=55 // pred_fallthru
          _
        // Predicated region
        $region61: #{tpu_custom_call.1} parent=55 // pred_check
          %p632 = pneg %p168
        $region62: #{tpu_custom_call.1} parent=55 // pred_check_branch
          %634 = sbr.rel (%p632) target = $region64
        $region63: #{tpu_custom_call.1} parent=55 // pred_region
          %s635 = sand.u32 %s153, 1
          %s636 = scalar_lea.sflag [#allocation11], %s635
          %s637 = sand.u32 %s153, 1
          %s638 = smul.addr %s637, 8
          %s639 = scalar_lea.vmem [#allocation10], %s638
          %640 = dma.done %s636, 128
        $region64: #{tpu_custom_call.1} parent=55 // pred_fallthru
          _
      $region56: #{tpu_custom_call.1} parent=5 // pred_fallthru
        _
    $region6: #{tpu_custom_call.1} parent=1 // loop_footer
      %s26 = sadd.s32 1, %s22
    $region7: #{tpu_custom_call.1} parent=1 // loop_footer_branch
      %21 = sbr.rel target = $region3
    $region8: #{tpu_custom_call.1} parent=1 // loop_exit
      _
    %641 = vsyncpa [#allocation3], 1
    %s642 = scalar_lea.sflag [#allocation3], 1
    %643 = vsyncpa %s642, 1
    %644 = vsyncpa [#allocation8], 1
    %645 = vsyncpa [#allocation4], 1
    %s646 = scalar_lea.sflag [#allocation4], 1
    %647 = vsyncpa %s646, 1
    %648 = vsyncpa [#allocation11], 1
    %s649 = scalar_lea.sflag [#allocation11], 1
    %650 = vsyncpa %s649, 1
    %651 = vsyncpa [#allocation5], 1
    %s652 = scalar_lea.sflag [#allocation5], 1
    %653 = vsyncpa %s652, 1

</llo_original>
